<compile_context>
chip_gen: v5e
topology: v5e:2x2
jax: 0.10.0
libtpu: 0.0.40
codegen_flags: <defaults>
</compile_context>

<pallas_src>
import jax
import jax.numpy as jnp
from jax import lax
from jax.experimental import pallas as pl
from jax.experimental.pallas import tpu as pltpu


def _round_up(x, m):
    return ((x + m - 1) // m) * m


def _maybe_pad_cols(width):
    """Pad a trailing (lane) width to a 128-multiple only when cheap (<= 4/3)."""
    padded = _round_up(width, 128)
    return padded if padded * 3 <= width * 4 else width


def _tile_bytes(rows, cols, itemsize):
    # VMEM layout pads a 2-D tile to (8, 128) granules.
    return _round_up(max(rows, 1), 8) * _round_up(max(cols, 1), 128) * itemsize


def _vmem_footprint(tn, d, rep, m_out, w_out, mm_bytes):
    return (
        2 * _tile_bytes(tn, d, 4)            # f tile (f32), double-buffered
        + 2 * _tile_bytes(tn, rep, 4)        # xr tile (f32), double-buffered
        + 1 * _tile_bytes(m_out, d, mm_bytes)    # s_n   (single buffer)
        + 1 * _tile_bytes(w_out, rep, mm_bytes)  # W_rep (single buffer)
        + 1 * _tile_bytes(1, w_out, 4)           # b_rep (single buffer)
        + 2 * _tile_bytes(tn, m_out, 4)      # cls tile,  double-buffered
        + 2 * _tile_bytes(tn, w_out, 4)      # bbox tile, double-buffered
    )


# --------------------------------------------------------------------------
# Fused kernel: one row-tile of ROIs per grid step.
#   f_ref : [tn, D]      ROI cosine features (row tile, f32)
#   s_ref : [Mo, D]      support features, PRE-normalized in the wrapper
#   x_ref : [tn, R]      bbox-head input (row tile, f32)
#   w_ref : [Wo, R]      pre-tiled bbox weight (rows = 4*k [+ zero pad])
#   b_ref : [1, Wo]      pre-tiled bbox bias (f32)
#   cls_ref  : [tn, Mo]  (f32)
#   bbox_ref : [tn, Wo]  (f32)
# --------------------------------------------------------------------------
def _fused_predictor_kernel(f_ref, s_ref, x_ref, w_ref, b_ref,
                            cls_ref, bbox_ref):
    # ---- cosine-similarity head ------------------------------------------
    f32 = f_ref[...]
    # F.normalize(x, dim=-1) == x * rsqrt(max(sum(x*x), 1e-24)); folded into a
    # per-row scale of the matmul output.  Norm math stays in f32 (epsilon!).
    f_inv = lax.rsqrt(jnp.maximum(jnp.sum(f32 * f32, axis=-1, keepdims=True),
                                  1e-24))
    f_mm = f32.astype(s_ref.dtype)          # bf16 (or f32) for the MXU
    g = lax.dot_general(f_mm, s_ref[...],
                        dimension_numbers=(((1,), (1,)), ((), ())),
                        preferred_element_type=jnp.float32)
    cls_ref[...] = (0.3 * f_inv) * g

    # ---- bbox head (weights already class-repeated in the wrapper) --------
    x_mm = x_ref[...].astype(w_ref.dtype)
    bbox = lax.dot_general(x_mm, w_ref[...],
                           dimension_numbers=(((1,), (1,)), ((), ())),
                           preferred_element_type=jnp.float32)
    bbox_ref[...] = bbox + b_ref[...]


# --------------------------------------------------------------------------
# Wrapper: one-time weight prep + one pallas_call with a parallel row grid.
# --------------------------------------------------------------------------
def fpn_predictor_cosine(f_roi_logits, sup_features_logits, xr,
                         bbox_w, bbox_b, num_bbox_reg_classes,
                         *, tile_rows=512, use_bf16_matmul=True):
    n, d = f_roi_logits.shape
    m, _ = sup_features_logits.shape
    _, rep = xr.shape
    k = int(num_bbox_reg_classes)
    mm_dtype = jnp.bfloat16 if use_bf16_matmul else jnp.float32
    mm_bytes = 2 if use_bf16_matmul else 4

    # ---- grid-invariant operands prepared ONCE in the wrapper -------------
    # Support-side normalization hoisted out of the per-tile loop (f32 math).
    s = sup_features_logits.astype(jnp.float32)
    s_n = s * lax.rsqrt(jnp.maximum(jnp.sum(s * s, axis=-1, keepdims=True),
                                    1e-24))
    m_out = _maybe_pad_cols(m)
    if m_out != m:
        s_n = jnp.pad(s_n, ((0, m_out - m), (0, 0)))   # zero rows -> zero cols
    s_n = s_n.astype(mm_dtype)

    # Class-wise repeat of the bbox head (moves .repeat(1, k) out of kernel).
    w_rep = jnp.tile(bbox_w.astype(jnp.float32), (k, 1))                # [4k,R]
    b_rep = jnp.tile(jnp.reshape(bbox_b.astype(jnp.float32), (1, 4)), (1, k))
    out_w = 4 * k
    w_out = _maybe_pad_cols(out_w)
    if w_out != out_w:
        w_rep = jnp.pad(w_rep, ((0, w_out - out_w), (0, 0)))
        b_rep = jnp.pad(b_rep, ((0, 0), (0, w_out - out_w)))
    w_rep = w_rep.astype(mm_dtype)

    # ---- row tiling: no row padding, ragged last block, grid >= 2 when
    #      possible (so the "parallel" axis shards across v7x's 2 TCs) -------
    if n >= 16:
        tn = min(int(tile_rows), _round_up(pl.cdiv(n, 2), 8))
    else:
        tn = n
    # Cap the tile so the double-buffered footprint fits a v7x-safe budget.
    VMEM_BUDGET = 40 * 2**20
    while tn > 8 and _vmem_footprint(tn, d, rep, m_out, w_out,
                                     mm_bytes) > VMEM_BUDGET:
        tn = max(8, _round_up(tn // 2, 8))
    grid = (pl.cdiv(n, tn),)

    footprint = _vmem_footprint(tn, d, rep, m_out, w_out, mm_bytes)
    vmem_limit = int(min(48 * 2**20, max(8 * 2**20, 2 * footprint)))

    const_buf = pl.Buffered(1)   # grid-invariant inputs: single pipeline buffer

    cls_out, bbox_out = pl.pallas_call(
        _fused_predictor_kernel,
        out_shape=(
            jax.ShapeDtypeStruct((n, m_out), jnp.float32),
            jax.ShapeDtypeStruct((n, w_out), jnp.float32),
        ),
        grid_spec=pltpu.PrefetchScalarGridSpec(
            num_scalar_prefetch=0,
            grid=grid,
            in_specs=[
                pl.BlockSpec((tn, d), lambda i: (i, 0)),            # f (tiled)
                pl.BlockSpec((m_out, d), lambda i: (0, 0),
                             pipeline_mode=const_buf),              # s_n
                pl.BlockSpec((tn, rep), lambda i: (i, 0)),          # xr (tiled)
                pl.BlockSpec((w_out, rep), lambda i: (0, 0),
                             pipeline_mode=const_buf),              # W_rep
                pl.BlockSpec((1, w_out), lambda i: (0, 0),
                             pipeline_mode=const_buf),              # b_rep
            ],
            out_specs=[
                pl.BlockSpec((tn, m_out), lambda i: (i, 0)),
                pl.BlockSpec((tn, w_out), lambda i: (i, 0)),
            ],
        ),
        compiler_params=pltpu.CompilerParams(
            dimension_semantics=("parallel",),
            vmem_limit_bytes=vmem_limit,
        ),
    )(f_roi_logits.astype(jnp.float32), s_n,
      xr.astype(jnp.float32), w_rep, b_rep)

    # Only slice when lane padding was actually applied (rare, small).
    if m_out != m:
        cls_out = cls_out[:, :m]
    if w_out != out_w:
        bbox_out = bbox_out[:, :out_w]
    return cls_out, bbox_out


# --------------------------------------------------------------------------
# Plain-JAX reference (mirrors the PyTorch forward; full-precision matmuls).
# --------------------------------------------------------------------------
def _reference(f, s, xr, w, b, k):
    hi = lax.Precision.HIGHEST
    f_n = f / jnp.maximum(jnp.linalg.norm(f, axis=-1, keepdims=True), 1e-12)
    s_n = s / jnp.maximum(jnp.linalg.norm(s, axis=-1, keepdims=True), 1e-12)
    cls = 0.3 * jnp.matmul(f_n, s_n.T, precision=hi)
    bbox = jnp.tile(jnp.matmul(xr, w.T, precision=hi) + jnp.reshape(b, (1, 4)),
                    (1, k))
    return cls, bbox


if __name__ == "__main__":
    key = jax.random.PRNGKey(0)

    configs = [
        dict(N=8, M=8, D=32, REP=32, K=8),      # aligned toy shapes
        dict(N=20, M=5, D=32, REP=32, K=3),     # unaligned, narrow outputs
        dict(N=600, M=100, D=64, REP=64, K=5),  # multi-tile ragged grid + pad
    ]

    for cfg in configs:
        N, M, D, REP, K = cfg["N"], cfg["M"], cfg["D"], cfg["REP"], cfg["K"]
        key, k1, k2, k3, k4 = jax.random.split(key, 5)

        f_roi_logits = jax.random.normal(k1, (N, D), dtype=jnp.float32)
        sup_features_logits = jax.random.normal(k2, (M, D), dtype=jnp.float32)
        xr = jax.random.normal(k3, (N, REP), dtype=jnp.float32)

        # Parameters mirroring __init__: weight ~ N(0, 0.001^2), bias = 0.
        bbox_w = 0.001 * jax.random.normal(k4, (4, REP), dtype=jnp.float32)
        bbox_b = jnp.zeros((4,), dtype=jnp.float32)

        ref_cls, ref_bbox = _reference(f_roi_logits, sup_features_logits, xr,
                                       bbox_w, bbox_b, K)

        # Exact path (f32 MXU).
        cls_f32, bbox_f32 = fpn_predictor_cosine(
            f_roi_logits, sup_features_logits, xr, bbox_w, bbox_b, K,
            use_bf16_matmul=False)
        jax.block_until_ready((cls_f32, bbox_f32))
        assert cls_f32.shape == (N, M) and bbox_f32.shape == (N, 4 * K)
        assert jnp.allclose(cls_f32, ref_cls, atol=2e-5, rtol=1e-4), \
            "cls f32 mismatch"
        assert jnp.allclose(bbox_f32, ref_bbox, atol=2e-5, rtol=1e-4), \
            "bbox f32 mismatch"

        # Fast path (bf16 MXU operands, f32 norms + f32 accumulation).
        cls_bf, bbox_bf = fpn_predictor_cosine(
            f_roi_logits, sup_features_logits, xr, bbox_w, bbox_b, K,
            use_bf16_matmul=True)
        jax.block_until_ready((cls_bf, bbox_bf))
        assert cls_bf.shape == (N, M) and bbox_bf.shape == (N, 4 * K)
        assert jnp.allclose(cls_bf, ref_cls, atol=1e-2, rtol=5e-2), \
            "cls bf16 mismatch"
        assert jnp.allclose(bbox_bf, ref_bbox, atol=2e-3, rtol=5e-2), \
            "bbox bf16 mismatch"

    print("KERNEL_OK")
</pallas_src>

<mosaic_0001>
module attributes {stable_mosaic.version = 11 : i64} {
  func.func @_fused_predictor_kernel(%arg0: i32, %arg1: memref<8x32xf32, #tpu.memory_space<vmem>>, %arg2: memref<8x32xf32, #tpu.memory_space<vmem>>, %arg3: memref<8x32xf32, #tpu.memory_space<vmem>>, %arg4: memref<32x32xf32, #tpu.memory_space<vmem>>, %arg5: memref<1x32xf32, #tpu.memory_space<vmem>>, %arg6: memref<8x8xf32, #tpu.memory_space<vmem>>, %arg7: memref<8x32xf32, #tpu.memory_space<vmem>>) attributes {dimension_semantics = [#tpu.dimension_semantics<parallel>], iteration_bounds = array<i64: 1>, scalar_prefetch = 0 : i64, scratch_operands = 0 : i64, tpu.core_type = #tpu.core_type<tc>, window_params = [{transform_indices = @transform_0, window_bounds = array<i64: 8, 32>}, {pipeline_mode = #tpu.pipeline_mode<synchronous>, transform_indices = @transform_1, window_bounds = array<i64: 8, 32>}, {transform_indices = @transform_2, window_bounds = array<i64: 8, 32>}, {pipeline_mode = #tpu.pipeline_mode<synchronous>, transform_indices = @transform_3, window_bounds = array<i64: 32, 32>}, {pipeline_mode = #tpu.pipeline_mode<synchronous>, transform_indices = @transform_4, window_bounds = array<i64: 1, 32>}, {transform_indices = @transform_5, window_bounds = array<i64: 8, 8>}, {transform_indices = @transform_6, window_bounds = array<i64: 8, 32>}]} {
    %c0 = arith.constant 0 : index
    %c0_0 = arith.constant 0 : index
    %0 = vector.load %arg1[%c0, %c0_0] : memref<8x32xf32, #tpu.memory_space<vmem>>, vector<8x32xf32>
    %1 = arith.mulf %0, %0 : vector<8x32xf32>
    %cst = arith.constant dense<0.000000e+00> : vector<8xf32>
    %2 = vector.multi_reduction <add>, %1, %cst [1] : vector<8x32xf32> to vector<8xf32>
    %3 = vector.shape_cast %2 : vector<8xf32> to vector<8x1xf32>
    %cst_1 = arith.constant 1.000000e-24 : f32
    %4 = vector.broadcast %cst_1 : f32 to vector<8x1xf32>
    %5 = arith.maximumf %3, %4 : vector<8x1xf32>
    %6 = math.rsqrt %5 : vector<8x1xf32>
    %c0_2 = arith.constant 0 : index
    %c0_3 = arith.constant 0 : index
    %7 = vector.load %arg2[%c0_2, %c0_3] : memref<8x32xf32, #tpu.memory_space<vmem>>, vector<8x32xf32>
    %cst_4 = arith.constant dense<0.000000e+00> : vector<8x8xf32>
    %8 = tpu.matmul %0, %7, %cst_4 {dimension_numbers = #tpu.dot_dimension_numbers<[1], [1], [0], [0], [0, 0, 1, 0], [], []>} : vector<8x32xf32>, vector<8x32xf32>, vector<8x8xf32> -> vector<8x8xf32>
    %cst_5 = arith.constant 3.000000e-01 : f32
    %9 = vector.broadcast %cst_5 : f32 to vector<8x1xf32>
    %10 = arith.mulf %9, %6 : vector<8x1xf32>
    %11 = vector.broadcast %10 : vector<8x1xf32> to vector<8x8xf32>
    %12 = arith.mulf %11, %8 : vector<8x8xf32>
    %c0_6 = arith.constant 0 : index
    %c0_7 = arith.constant 0 : index
    %13 = vector.load %arg6[%c0_6, %c0_7] : memref<8x8xf32, #tpu.memory_space<vmem>>, vector<8x8xf32>
    tpu.vector_store %arg6[%c0_6, %c0_7], %12 {strides = array<i32>} : memref<8x8xf32, #tpu.memory_space<vmem>>, vector<8x8xf32>,
    %c0_8 = arith.constant 0 : index
    %c0_9 = arith.constant 0 : index
    %14 = vector.load %arg3[%c0_8, %c0_9] : memref<8x32xf32, #tpu.memory_space<vmem>>, vector<8x32xf32>
    %c0_10 = arith.constant 0 : index
    %c0_11 = arith.constant 0 : index
    %15 = vector.load %arg4[%c0_10, %c0_11] : memref<32x32xf32, #tpu.memory_space<vmem>>, vector<32x32xf32>
    %cst_12 = arith.constant dense<0.000000e+00> : vector<8x32xf32>
    %16 = tpu.matmul %14, %15, %cst_12 {dimension_numbers = #tpu.dot_dimension_numbers<[1], [1], [0], [0], [0, 0, 1, 0], [], []>} : vector<8x32xf32>, vector<32x32xf32>, vector<8x32xf32> -> vector<8x32xf32>
    %c0_13 = arith.constant 0 : index
    %c0_14 = arith.constant 0 : index
    %17 = vector.load %arg5[%c0_13, %c0_14] : memref<1x32xf32, #tpu.memory_space<vmem>>, vector<1x32xf32>
    %18 = vector.broadcast %17 : vector<1x32xf32> to vector<8x32xf32>
    %19 = arith.addf %16, %18 : vector<8x32xf32>
    %c0_15 = arith.constant 0 : index
    %c0_16 = arith.constant 0 : index
    %20 = vector.load %arg7[%c0_15, %c0_16] : memref<8x32xf32, #tpu.memory_space<vmem>>, vector<8x32xf32>
    tpu.vector_store %arg7[%c0_15, %c0_16], %19 {strides = array<i32>} : memref<8x32xf32, #tpu.memory_space<vmem>>, vector<8x32xf32>,
    return
  }
  func.func @transform_0(%arg0: i32) -> (i32, i32) {
    %c0_i32 = arith.constant 0 : i32
    %c0_i32_0 = arith.constant 0 : i32
    return %arg0, %c0_i32 : i32, i32
  }
  func.func @transform_1(%arg0: i32) -> (i32, i32) {
    %c0_i32 = arith.constant 0 : i32
    %c0_i32_0 = arith.constant 0 : i32
    %c0_i32_1 = arith.constant 0 : i32
    return %c0_i32, %c0_i32_0 : i32, i32
  }
  func.func @transform_2(%arg0: i32) -> (i32, i32) {
    %c0_i32 = arith.constant 0 : i32
    %c0_i32_0 = arith.constant 0 : i32
    return %arg0, %c0_i32 : i32, i32
  }
  func.func @transform_3(%arg0: i32) -> (i32, i32) {
    %c0_i32 = arith.constant 0 : i32
    %c0_i32_0 = arith.constant 0 : i32
    %c0_i32_1 = arith.constant 0 : i32
    return %c0_i32, %c0_i32_0 : i32, i32
  }
  func.func @transform_4(%arg0: i32) -> (i32, i32) {
    %c0_i32 = arith.constant 0 : i32
    %c0_i32_0 = arith.constant 0 : i32
    %c0_i32_1 = arith.constant 0 : i32
    return %c0_i32, %c0_i32_0 : i32, i32
  }
  func.func @transform_5(%arg0: i32) -> (i32, i32) {
    %c0_i32 = arith.constant 0 : i32
    %c0_i32_0 = arith.constant 0 : i32
    return %arg0, %c0_i32 : i32, i32
  }
  func.func @transform_6(%arg0: i32) -> (i32, i32) {
    %c0_i32 = arith.constant 0 : i32
    %c0_i32_0 = arith.constant 0 : i32
    return %arg0, %c0_i32 : i32, i32
  }
}

</mosaic_0001>

<llo_original>
// kernel: tpu_custom_call.1
$region0: #{tpu_custom_call.1}
  #allocation0 [shape = 'u32[]', space=smem, size = 0x4, offset = 0x4, fixed_abs, tag = 'smem constant byte address 0x4 - core index']
  #allocation1 [shape = 'u32[72,128]{1,0:T(1,128)}', space=vmem, size = 0x9000, scoped, tag = 'internal scratch']
  %s0 = inlined_call_operand.hbm [shape: f32[8,32], index: 0, kind: input, shape index: {}]
  %s1 = inlined_call_operand.hbm [shape: f32[8,32], index: 1, kind: input, shape index: {}]
  %s2 = inlined_call_operand.hbm [shape: f32[8,32], index: 2, kind: input, shape index: {}]
  %s3 = inlined_call_operand.hbm [shape: f32[32,32], index: 3, kind: input, shape index: {}]
  %s4 = inlined_call_operand.vmem [shape: f32[1,32], index: 4, kind: input, shape index: {}]
  %s5 = inlined_call_operand.hbm [shape: f32[8,8], index: 5, kind: output, shape index: {0}]
  %s6 = inlined_call_operand.hbm [shape: f32[8,32], index: 6, kind: output, shape index: {1}]
  %7 = xla_tuple %s5, %s6
  %s8 = sld [smem:[#allocation0]]
  $region54: #{tpu_custom_call.1} parent=0
    _
  %s10 = ssub.s32 1, %s8
  %s11 = scalar_select 0, %s10, %s8
  $region1: #{tpu_custom_call.1} parent=0
    #allocation2 [shape = 'u8[4096]{0}', space=vmem, size = 0x1000, scoped, tag = 'input window, operand 0, single buffered']
    #allocation3 [shape = 's32[1]{0}', space=sflag, size = 0x4, scoped, tag = 'scoped memory for tpu_custom_call.1']
    #allocation4 [shape = 's32[1]{0}', space=sflag, size = 0x4, scoped, tag = 'scoped memory for tpu_custom_call.1']
    #allocation5 [shape = 'u8[4096]{0}', space=vmem, size = 0x1000, scoped, tag = 'input window, operand 1, single buffered']
    #allocation6 [shape = 's32[1]{0}', space=sflag, size = 0x4, scoped, tag = 'scoped memory for tpu_custom_call.1']
    #allocation7 [shape = 'u8[4096]{0}', space=vmem, size = 0x1000, scoped, tag = 'input window, operand 2, single buffered']
    #allocation8 [shape = 'u8[16384]{0}', space=vmem, size = 0x4000, scoped, tag = 'input window, operand 3, single buffered']
    #allocation9 [shape = 's32[1]{0}', space=sflag, size = 0x4, scoped, tag = 'scoped memory for tpu_custom_call.1']
    #allocation10 [shape = 'u8[4096]{0}', space=vmem, size = 0x1000, scoped, tag = 'output window, operand 0, single buffered']
    #allocation11 [shape = 'u8[4096]{0}', space=vmem, size = 0x1000, scoped, tag = 'output window, operand 1, single buffered']
    #allocation12 [shape = 's32[1]{0}', space=sflag, size = 0x4, scoped, tag = 'scoped memory for tpu_custom_call.1']
    %12 = vsyncpa [#allocation3], 0
    %13 = vsyncpa [#allocation6], 0
    %14 = vsyncpa [#allocation9], 0
    %15 = vsyncpa [#allocation4], 0
    %16 = vsyncpa [#allocation12], 0
    // Predicated region
    $region2: #{tpu_custom_call.1} parent=1 // pred_check
      _
    $region3: #{tpu_custom_call.1} parent=1 // pred_check_branch
      %18 = sbr.rel (0) target = $region5
    $region4: #{tpu_custom_call.1} parent=1 // pred_region
      %20 = vsyncadd [#allocation3], 0
      %s22 = sshll.u32 %s0, 4
      %s23 = int_to_ptr.hbm [resolvable:$true] %s22
      %s24 = sshll.u32 [#allocation2], 4
      %s25 = int_to_ptr.vmem [resolvable:$true] %s24
      %27 = dma.hbm_to_vmem [thread:$0]  %s23, 128, %s25, [#allocation3]
    $region5: #{tpu_custom_call.1} parent=1 // pred_fallthru
      _
    // Predicated region
    $region6: #{tpu_custom_call.1} parent=1 // pred_check
      _
    $region7: #{tpu_custom_call.1} parent=1 // pred_check_branch
      %29 = sbr.rel (0) target = $region9
    $region8: #{tpu_custom_call.1} parent=1 // pred_region
      %31 = vsyncadd [#allocation6], 0
      %s33 = sshll.u32 %s1, 4
      %s34 = int_to_ptr.hbm [resolvable:$true] %s33
      %s35 = sshll.u32 [#allocation5], 4
      %s36 = int_to_ptr.vmem [resolvable:$true] %s35
      %38 = dma.hbm_to_vmem [thread:$0]  %s34, 128, %s36, [#allocation6]
    $region9: #{tpu_custom_call.1} parent=1 // pred_fallthru
      _
    // Predicated region
    $region10: #{tpu_custom_call.1} parent=1 // pred_check
      _
    $region11: #{tpu_custom_call.1} parent=1 // pred_check_branch
      %40 = sbr.rel (0) target = $region13
    $region12: #{tpu_custom_call.1} parent=1 // pred_region
      %42 = vsyncadd [#allocation6], 0
      %s44 = sshll.u32 %s2, 4
      %s45 = int_to_ptr.hbm [resolvable:$true] %s44
      %s46 = sshll.u32 [#allocation7], 4
      %s47 = int_to_ptr.vmem [resolvable:$true] %s46
      %49 = dma.hbm_to_vmem [thread:$0]  %s45, 128, %s47, [#allocation6]
    $region13: #{tpu_custom_call.1} parent=1 // pred_fallthru
      _
    // Predicated region
    $region14: #{tpu_custom_call.1} parent=1 // pred_check
      _
    $region15: #{tpu_custom_call.1} parent=1 // pred_check_branch
      %51 = sbr.rel (0) target = $region17
    $region16: #{tpu_custom_call.1} parent=1 // pred_region
      %53 = vsyncadd [#allocation9], 0
      %s54 = sshll.u32 %s3, 4
      %s55 = int_to_ptr.hbm [resolvable:$true] %s54
      %s56 = sshll.u32 [#allocation8], 4
      %s57 = int_to_ptr.vmem [resolvable:$true] %s56
      %62 = dma.hbm_to_vmem [thread:$0]  %s55, 512, %s57, [#allocation9], 128, 128, 8
    $region17: #{tpu_custom_call.1} parent=1 // pred_fallthru
      _
    // Predicated region
    $region18: #{tpu_custom_call.1} parent=1 // pred_check
      _
    $region19: #{tpu_custom_call.1} parent=1 // pred_check_branch
      %64 = sbr.rel (0) target = $region21
    $region20: #{tpu_custom_call.1} parent=1 // pred_region
      _
    $region21: #{tpu_custom_call.1} parent=1 // pred_fallthru
      _
    // Predicated region
    $region22: #{tpu_custom_call.1} parent=1 // pred_check
      _
    $region23: #{tpu_custom_call.1} parent=1 // pred_check_branch
      %66 = sbr.rel (0) target = $region25
    $region24: #{tpu_custom_call.1} parent=1 // pred_region
      %68 = dma.done [#allocation3], 128
    $region25: #{tpu_custom_call.1} parent=1 // pred_fallthru
      _
    // Predicated region
    $region26: #{tpu_custom_call.1} parent=1 // pred_check
      _
    $region27: #{tpu_custom_call.1} parent=1 // pred_check_branch
      %70 = sbr.rel (0) target = $region29
    $region28: #{tpu_custom_call.1} parent=1 // pred_region
      %72 = dma.done [#allocation6], 128
    $region29: #{tpu_custom_call.1} parent=1 // pred_fallthru
      _
    // Predicated region
    $region30: #{tpu_custom_call.1} parent=1 // pred_check
      _
    $region31: #{tpu_custom_call.1} parent=1 // pred_check_branch
      %74 = sbr.rel (0) target = $region33
    $region32: #{tpu_custom_call.1} parent=1 // pred_region
      %76 = dma.done [#allocation6], 128
    $region33: #{tpu_custom_call.1} parent=1 // pred_fallthru
      _
    // Predicated region
    $region34: #{tpu_custom_call.1} parent=1 // pred_check
      _
    $region35: #{tpu_custom_call.1} parent=1 // pred_check_branch
      %78 = sbr.rel (0) target = $region37
    $region36: #{tpu_custom_call.1} parent=1 // pred_region
      %80 = dma.done [#allocation9], 512
    $region37: #{tpu_custom_call.1} parent=1 // pred_fallthru
      _
    %v81 = vld [vmem:[#allocation2] sm:$0xff]
    %v82 = vmul.f32 %v81, %v81
    %vm83 = vcmask 261120
    %v84 = vsel %vm83, %v82, 0.0
    %85 = vadd.xlane.f32.xlu0 %v84
    %v86 = vpop.xlane.xlu0 %85
    %v87 = vmax.f32 %v86, 1e-24
    %v88 = vrsqrt.pop %v87
    %v89 = vmul.f32 %v88, %v87
    %v90 = vmul.f32 %v89, %v88
    %v91 = vmul.f32 0.5, %v90
    %v92 = vsub.f32 1.5, %v91
    %v93 = vmul.f32 %v88, %v92
    %vm94 = vweird.f32 %v87
    %vm95 = vweird.f32 %v88
    %vm96 = vmor %vm94, %vm95
    %v97 = vsel %vm96, %v88, %v93
    %v98 = vld [vmem:[#allocation5] sm:$0xff]
    %v100 = vsel %vm83, %v81, 0
    %v103 = vsel %vm83, %v98, 0
    %105 = vmatpush.xpose.msra.mxu0 0.0
    %106 = vmatpush.xpose.msra.mxu0 0.0
    %107 = vmatpush.xpose.msra.mxu0 0.0
    %108 = vmatpush.xpose.msra.mxu0 0.0
    %109 = vmatpush.xpose.msra.mxu0 0.0
    %110 = vmatpush.xpose.msra.mxu0 0.0
    %111 = vmatpush.xpose.msra.mxu0 0.0
    %112 = vmatpush.xpose.msra.mxu0 0.0
    %113 = vmatpush.xpose.msra.mxu0 0.0
    %114 = vmatpush.xpose.msra.mxu0 0.0
    %115 = vmatpush.xpose.msra.mxu0 0.0
    %116 = vmatpush.xpose.msra.mxu0 0.0
    %117 = vmatpush.xpose.msra.mxu0 0.0
    %118 = vmatpush.xpose.msra.mxu0 0.0
    %119 = vmatpush.xpose.msra.mxu0 0.0
    %120 = vmatpush.xpose.msra.mxu0 %v103
    %121 = vmatmul.f32.gmra.mxu0 %v100
    %v122 = vpop.f32.mrf.mxu0
    %v123 = vadd.f32 0.0, %v122
    %124 = vdwg.mxu0
    %v125 = vmul.f32 %v97, 0.3
    %v126 = vmul.f32 %v125, %v123
    %vm127 = vcmask 64512
    %128 = vst.msk [vmem:[#allocation10] sm:$0xff] %vm127, %v126
    %v129 = vld [vmem:[#allocation7] sm:$0xff]
    %v130 = vld [vmem:[#allocation8] sm:$0xff]
    %v131 = vld [vmem:[#allocation8 + $0x8] sm:$0xff]
    %v132 = vld [vmem:[#allocation8 + $0x10] sm:$0xff]
    %v133 = vld [vmem:[#allocation8 + $0x18] sm:$0xff]
    %v134 = vld [vmem:[%s4] sm:$0x1]
    %v136 = vperm.slane %v134, 0
    %v139 = vsel %vm83, %v129, 0
    %v142 = vsel %vm83, %v130, 0
    %v145 = vsel %vm83, %v131, 0
    %v148 = vsel %vm83, %v132, 0
    %v151 = vsel %vm83, %v133, 0
    %153 = vmatpush.xpose.msra.mxu0 0.0
    %154 = vmatpush.xpose.msra.mxu0 0.0
    %155 = vmatpush.xpose.msra.mxu0 0.0
    %156 = vmatpush.xpose.msra.mxu0 0.0
    %157 = vmatpush.xpose.msra.mxu0 0.0
    %158 = vmatpush.xpose.msra.mxu0 0.0
    %159 = vmatpush.xpose.msra.mxu0 0.0
    %160 = vmatpush.xpose.msra.mxu0 0.0
    %161 = vmatpush.xpose.msra.mxu0 0.0
    %162 = vmatpush.xpose.msra.mxu0 0.0
    %163 = vmatpush.xpose.msra.mxu0 0.0
    %164 = vmatpush.xpose.msra.mxu0 0.0
    %165 = vmatpush.xpose.msra.mxu0 %v151
    %166 = vmatpush.xpose.msra.mxu0 %v148
    %167 = vmatpush.xpose.msra.mxu0 %v145
    %168 = vmatpush.xpose.msra.mxu0 %v142
    %169 = vmatmul.f32.gmra.mxu0 %v139
    %v170 = vpop.f32.mrf.mxu0
    %v171 = vadd.f32 %v136, %v170
    %172 = vdwg.mxu0
    %173 = vst.msk [vmem:[#allocation11] sm:$0xff] %vm83, %v171
    // Predicated region
    $region38: #{tpu_custom_call.1} parent=1 // pred_check
      _
    $region39: #{tpu_custom_call.1} parent=1 // pred_check_branch
      %175 = sbr.rel (0) target = $region41
    $region40: #{tpu_custom_call.1} parent=1 // pred_region
      %177 = vsyncadd [#allocation4], 0
      %s179 = sshll.u32 [#allocation10], 4
      %s180 = int_to_ptr.vmem [resolvable:$true] %s179
      %s181 = sshll.u32 %s5, 4
      %s182 = int_to_ptr.hbm [resolvable:$true] %s181
      %184 = dma.vmem_to_hbm [thread:$0]  %s180, 128, %s182, [#allocation4]
    $region41: #{tpu_custom_call.1} parent=1 // pred_fallthru
      _
    // Predicated region
    $region42: #{tpu_custom_call.1} parent=1 // pred_check
      _
    $region43: #{tpu_custom_call.1} parent=1 // pred_check_branch
      %186 = sbr.rel (0) target = $region45
    $region44: #{tpu_custom_call.1} parent=1 // pred_region
      %188 = vsyncadd [#allocation12], 0
      %s190 = sshll.u32 [#allocation11], 4
      %s191 = int_to_ptr.vmem [resolvable:$true] %s190
      %s192 = sshll.u32 %s6, 4
      %s193 = int_to_ptr.hbm [resolvable:$true] %s192
      %195 = dma.vmem_to_hbm [thread:$0]  %s191, 128, %s193, [#allocation12]
    $region45: #{tpu_custom_call.1} parent=1 // pred_fallthru
      _
    // Predicated region
    $region46: #{tpu_custom_call.1} parent=1 // pred_check
      _
    $region47: #{tpu_custom_call.1} parent=1 // pred_check_branch
      %197 = sbr.rel (0) target = $region49
    $region48: #{tpu_custom_call.1} parent=1 // pred_region
      %199 = dma.done [#allocation4], 128
    $region49: #{tpu_custom_call.1} parent=1 // pred_fallthru
      _
    // Predicated region
    $region50: #{tpu_custom_call.1} parent=1 // pred_check
      _
    $region51: #{tpu_custom_call.1} parent=1 // pred_check_branch
      %201 = sbr.rel (0) target = $region53
    $region52: #{tpu_custom_call.1} parent=1 // pred_region
      %203 = dma.done [#allocation12], 128
    $region53: #{tpu_custom_call.1} parent=1 // pred_fallthru
      _
    %204 = vsyncpa [#allocation3], 1
    %205 = vsyncpa [#allocation6], 1
    %206 = vsyncpa [#allocation9], 1
    %207 = vsyncpa [#allocation4], 1
    %208 = vsyncpa [#allocation12], 1

</llo_original>
